<compile_context>
chip_gen: v6e
topology: v6e:2x2x1
jax: 0.10.0
libtpu: 0.0.40
codegen_flags: <defaults>
</compile_context>

<pallas_src>
import math

import jax
import jax.numpy as jnp
from jax import lax
from jax.experimental import pallas as pl
from jax.experimental.pallas import tpu as pltpu


def _round_up(x, m):
    return ((x + m - 1) // m) * m


def _cdiv(a, b):
    return -(-a // b)


def _sublane(dtype):
    # minimum second-to-last tile multiple: f32 -> 8, bf16 -> 16, int8/fp8 -> 32
    return max(8, 32 // jnp.dtype(dtype).itemsize)


def _make_linear_kernel(has_bias, use_scratch):
    """Tiled matmul kernel: accumulates over the K grid axis.

    Refs: x(tm,tk), w(tk,tn), [bias(1,tn)], out(tm,tn), [acc(tm,tn) f32].
    If use_scratch is False the output is f32 and we accumulate directly
    into o_ref (it stays resident in VMEM across the K axis).
    """

    def kernel(*refs):
        if has_bias and use_scratch:
            x_ref, w_ref, b_ref, o_ref, acc_ref = refs
        elif has_bias:
            x_ref, w_ref, b_ref, o_ref = refs
            acc_ref = None
        elif use_scratch:
            x_ref, w_ref, o_ref, acc_ref = refs
            b_ref = None
        else:
            x_ref, w_ref, o_ref = refs
            b_ref = acc_ref = None

        k = pl.program_id(2)
        nk = pl.num_programs(2)
        acc = acc_ref if use_scratch else o_ref

        @pl.when(k == 0)
        def _():
            acc[...] = jnp.zeros_like(acc)

        # Plain NN contraction -- weight is already (K, N), no transpose needed.
        acc[...] += jnp.dot(x_ref[...], w_ref[...],
                            preferred_element_type=jnp.float32)

        @pl.when(k == nk - 1)
        def _():
            if use_scratch:
                out = acc_ref[...]
                if has_bias:
                    out = out + b_ref[...].astype(jnp.float32)
                o_ref[...] = out.astype(o_ref.dtype)
            elif has_bias:
                o_ref[...] = o_ref[...] + b_ref[...].astype(o_ref.dtype)

    return kernel


def prepare_linear_params(weight, bias=None, *, compute_dtype=None):
    """One-time parameter prep (do this at init, not per forward call).

    weight: (out_dim, in_dim) PyTorch layout -> returned as (in_dim, out_dim),
            optionally cast to compute_dtype (e.g. bf16).
    """
    w_kn = jnp.asarray(weight).T
    if compute_dtype is not None:
        w_kn = w_kn.astype(compute_dtype)
    b = None if bias is None else jnp.asarray(bias)
    return w_kn, b


def pallas_linear(x, w_kn, bias=None, *,
                  tm=None, tn=None, tk=None,
                  compute_dtype=None, out_dtype=None, use_pallas=None):
    """y = x @ w_kn + bias  (== torch.nn.Linear.forward with w_kn = weight.T).

    x:     (..., in_dim)
    w_kn:  (in_dim, out_dim)   -- pre-transposed via prepare_linear_params
    bias:  (out_dim,) or None
    compute_dtype: e.g. jnp.bfloat16; the cast happens here (wrapper), before
                   the pallas_call, so HBM traffic is already narrow.
    """
    orig_dtype = x.dtype
    if out_dtype is None:
        out_dtype = orig_dtype

    K, N = w_kn.shape
    assert x.shape[-1] == K
    lead_shape = x.shape[:-1]
    M = int(math.prod(lead_shape)) if lead_shape else 1

    # Wrapper-level cast (keeps the kernel free of VALU astype work and halves
    # HBM bytes for bf16).  Ideally the weight was already cast at prep time.
    if compute_dtype is not None and x.dtype != compute_dtype:
        x = x.astype(compute_dtype)
    w = w_kn
    if compute_dtype is not None and w.dtype != compute_dtype:
        w = w.astype(compute_dtype)

    # Size-gated dispatch: launch + per-grid-step overhead dominates tiny matmuls.
    if use_pallas is None:
        use_pallas = (2 * M * K * N) >= (2 * 256 ** 3)
    if not use_pallas:
        y = jnp.einsum("...k,kn->...n", x, w)
        if bias is not None:
            y = y + bias
        return y.astype(out_dtype)

    x2 = x.reshape(M, K)
    c_item = jnp.dtype(x2.dtype).itemsize

    # ---- Tile selection -----------------------------------------------------
    # Defaults sized for the MXU roofline while fitting v7x's 64 MiB VMEM.
    if tm is None:
        tm = 512 if c_item >= 4 else 768
    if tn is None:
        tn = 1024 if c_item >= 4 else 1536
    if tk is None:
        tk = 512 if c_item >= 4 else 1024

    sub = max(_sublane(x2.dtype), _sublane(out_dtype))
    tm = min(_round_up(tm, sub), _round_up(M, sub)) if M >= sub else M
    tn = min(_round_up(tn, 128), _round_up(N, 128)) if N >= 128 else N
    tk = min(_round_up(tk, 128), _round_up(K, 128)) if K >= 128 else K

    grid_m = _cdiv(M, tm)
    grid_n = _cdiv(N, tn)
    # Keep both v7x TensorCores busy: make sure the parallel axes have >=2 blocks.
    if grid_m * grid_n < 2 and N >= 256:
        tn = _round_up(_cdiv(N, 2), 128)
        grid_n = _cdiv(N, tn)

    # Only the K (reduction) tail needs real zero padding.
    Kp = _round_up(K, tk)
    grid_k = Kp // tk
    if Kp != K:
        x2 = jnp.pad(x2, ((0, 0), (0, Kp - K)))
        w = jnp.pad(w, ((0, Kp - K), (0, 0)))

    grid = (grid_m, grid_n, grid_k)

    in_specs = [
        pl.BlockSpec((tm, tk), lambda i, j, k: (i, k)),   # x tile
        pl.BlockSpec((tk, tn), lambda i, j, k: (k, j)),   # weight tile (K, N)
    ]
    operands = [x2, w]

    has_bias = bias is not None
    if has_bias:
        b2 = bias.reshape(1, N)
        in_specs.append(pl.BlockSpec((1, tn), lambda i, j, k: (0, j)))
        operands.append(b2)

    use_scratch = jnp.dtype(out_dtype) != jnp.dtype(jnp.float32)
    scratch_shapes = [pltpu.VMEM((tm, tn), jnp.float32)] if use_scratch else []

    x_item = jnp.dtype(x2.dtype).itemsize
    w_item = jnp.dtype(w.dtype).itemsize
    o_item = jnp.dtype(out_dtype).itemsize
    b_item = jnp.dtype(bias.dtype).itemsize if has_bias else 0

    # Accurate advisory cost: x re-read grid_n times, W re-read grid_m times.
    cost = pl.CostEstimate(
        flops=2 * M * Kp * N,
        transcendentals=0,
        bytes_accessed=int(M * Kp * x_item * grid_n
                           + Kp * N * w_item * grid_m
                           + M * N * o_item
                           + (N * b_item * grid_m if has_bias else 0)),
    )

    # Explicit VMEM budget (double-buffered inputs/outputs + optional scratch).
    vmem_est = (2 * tm * tk * x_item + 2 * tk * tn * w_item
                + 2 * tm * tn * o_item
                + (tm * tn * 4 if use_scratch else 0)
                + (2 * tn * b_item if has_bias else 0))
    vmem_limit = int(min(max(2 * vmem_est, 32 * 1024 * 1024), 60 * 1024 * 1024))

    out = pl.pallas_call(
        _make_linear_kernel(has_bias, use_scratch),
        out_shape=jax.ShapeDtypeStruct((M, N), out_dtype),
        grid=grid,
        in_specs=in_specs,
        out_specs=pl.BlockSpec((tm, tn), lambda i, j, k: (i, j)),
        scratch_shapes=scratch_shapes,
        compiler_params=pltpu.CompilerParams(
            dimension_semantics=("parallel", "parallel", "arbitrary"),
            vmem_limit_bytes=vmem_limit),
        cost_estimate=cost,
    )(*operands)

    return out.reshape(*lead_shape, N)


def init_linear_params(key, in_dim, out_dim, bias=True, w_init="linear",
                       dtype=jnp.float32):
    """Mirrors the PyTorch module's init:
       - weight: xavier_uniform_ with gain = calculate_gain(w_init) ('linear' -> 1.0)
       - bias:   nn.Linear default, U(-1/sqrt(fan_in), 1/sqrt(fan_in))
    Returns the weight in PyTorch layout (out_dim, in_dim)."""
    kw, kb = jax.random.split(key)
    gain = 1.0  # calculate_gain('linear') == 1.0
    bound_w = gain * math.sqrt(6.0 / (in_dim + out_dim))
    weight = jax.random.uniform(kw, (out_dim, in_dim), dtype=dtype,
                                minval=-bound_w, maxval=bound_w)
    b = None
    if bias:
        bound_b = 1.0 / math.sqrt(in_dim)
        b = jax.random.uniform(kb, (out_dim,), dtype=dtype,
                               minval=-bound_b, maxval=bound_b)
    return weight, b


if __name__ == "__main__":
    key = jax.random.PRNGKey(0)
    k1, k2, k3, k4, k5, k6 = jax.random.split(key, 6)

    # ---- Test 1: small module-like shapes, f32, forced through Pallas -------
    batch, seq, in_dim, out_dim = 2, 8, 32, 64
    x = jax.random.normal(k1, (batch, seq, in_dim), dtype=jnp.float32)
    weight, bias = init_linear_params(k2, in_dim, out_dim, bias=True)
    w_kn, b_p = prepare_linear_params(weight, bias)

    y = jax.block_until_ready(pallas_linear(x, w_kn, b_p, use_pallas=True))
    y_ref = jnp.einsum("bsk,nk->bsn", x, weight,
                       precision=lax.Precision.HIGHEST) + bias
    assert y.shape == (batch, seq, out_dim)
    assert jnp.allclose(y, y_ref, atol=1e-3, rtol=1e-3)

    # no-bias path
    y_nb = jax.block_until_ready(pallas_linear(x, w_kn, None, use_pallas=True))
    assert jnp.allclose(y_nb, y_ref - bias, atol=1e-3, rtol=1e-3)

    # ---- Test 2: ragged M/N (masked edge blocks), multi-step K accumulation,
    #      bias added once, f32 accumulate-directly-into-output path ----------
    batch2, seq2, in2, out2 = 2, 131, 256, 320   # M=262, N=320 (both unaligned)
    x2 = jax.random.normal(k3, (batch2, seq2, in2), dtype=jnp.float32)
    w2, bias2 = init_linear_params(k4, in2, out2, bias=True)
    w2_kn, _ = prepare_linear_params(w2)

    y2 = jax.block_until_ready(
        pallas_linear(x2, w2_kn, bias2, tm=128, tn=128, tk=128, use_pallas=True))
    y2_ref = jnp.einsum("bsk,nk->bsn", x2, w2,
                        precision=lax.Precision.HIGHEST) + bias2
    assert y2.shape == (batch2, seq2, out2)
    assert jnp.allclose(y2, y2_ref, atol=1e-3, rtol=1e-3)

    # ---- Test 3: bf16 compute (wrapper-level cast), f32 output --------------
    batch3, seq3, in3, out3 = 2, 64, 256, 256
    x3 = jax.random.normal(k5, (batch3, seq3, in3), dtype=jnp.float32)
    w3, bias3 = init_linear_params(k6, in3, out3, bias=True)
    w3_kn_bf16, _ = prepare_linear_params(w3, compute_dtype=jnp.bfloat16)

    y3 = jax.block_until_ready(
        pallas_linear(x3, w3_kn_bf16, bias3,
                      compute_dtype=jnp.bfloat16, use_pallas=True))
    y3_ref = jnp.einsum("bsk,nk->bsn", x3, w3,
                        precision=lax.Precision.HIGHEST) + bias3
    assert y3.dtype == jnp.float32
    assert jnp.allclose(y3, y3_ref, atol=5e-2, rtol=5e-2)

    # ---- Test 3b: fully bf16 in/out (exercises the f32 scratch + downcast) --
    y3b = jax.block_until_ready(
        pallas_linear(x3.astype(jnp.bfloat16), w3_kn_bf16, bias3,
                      use_pallas=True))
    assert y3b.dtype == jnp.bfloat16
    assert jnp.allclose(y3b.astype(jnp.float32), y3_ref, atol=1e-1, rtol=1e-1)

    print("KERNEL_OK")
</pallas_src>

<mosaic_0001>
module attributes {stable_mosaic.version = 11 : i64} {
  func.func @kernel(%arg0: i32, %arg1: i32, %arg2: i32, %arg3: memref<16x32xf32, #tpu.memory_space<vmem>>, %arg4: memref<32x64xf32, #tpu.memory_space<vmem>>, %arg5: memref<1x64xf32, #tpu.memory_space<vmem>>, %arg6: memref<16x64xf32, #tpu.memory_space<vmem>>) attributes {dimension_semantics = [#tpu.dimension_semantics<parallel>, #tpu.dimension_semantics<parallel>, #tpu.dimension_semantics<arbitrary>], iteration_bounds = array<i64: 1, 1, 1>, scalar_prefetch = 0 : i64, scratch_operands = 0 : i64, tpu.core_type = #tpu.core_type<tc>, window_params = [{transform_indices = @transform_0, window_bounds = array<i64: 16, 32>}, {transform_indices = @transform_1, window_bounds = array<i64: 32, 64>}, {transform_indices = @transform_2, window_bounds = array<i64: 1, 64>}, {transform_indices = @transform_3, window_bounds = array<i64: 16, 64>}]} {
    %c0_i32 = arith.constant 0 : i32
    %0 = arith.cmpi eq, %arg2, %c0_i32 : i32
    %1 = arith.extui %0 : i1 to i32
    %c0_i32_0 = arith.constant 0 : i32
    %2 = arith.cmpi ne, %1, %c0_i32_0 : i32
    scf.if %2 {
      %cst_10 = arith.constant 0.000000e+00 : f32
      %12 = vector.broadcast %cst_10 : f32 to vector<16x64xf32>
      %c0_11 = arith.constant 0 : index
      %c0_12 = arith.constant 0 : index
      %13 = vector.load %arg6[%c0_11, %c0_12] : memref<16x64xf32, #tpu.memory_space<vmem>>, vector<16x64xf32>
      tpu.vector_store %arg6[%c0_11, %c0_12], %12 {strides = array<i32>} : memref<16x64xf32, #tpu.memory_space<vmem>>, vector<16x64xf32>,
    } else {
    }
    %c0 = arith.constant 0 : index
    %c0_1 = arith.constant 0 : index
    %3 = vector.load %arg6[%c0, %c0_1] : memref<16x64xf32, #tpu.memory_space<vmem>>, vector<16x64xf32>
    %c0_2 = arith.constant 0 : index
    %c0_3 = arith.constant 0 : index
    %4 = vector.load %arg3[%c0_2, %c0_3] : memref<16x32xf32, #tpu.memory_space<vmem>>, vector<16x32xf32>
    %c0_4 = arith.constant 0 : index
    %c0_5 = arith.constant 0 : index
    %5 = vector.load %arg4[%c0_4, %c0_5] : memref<32x64xf32, #tpu.memory_space<vmem>>, vector<32x64xf32>
    %cst = arith.constant dense<0.000000e+00> : vector<16x64xf32>
    %6 = tpu.matmul %4, %5, %cst {dimension_numbers = #tpu.dot_dimension_numbers<[1], [0], [0], [1], [0, 0, 1, 1], [], []>} : vector<16x32xf32>, vector<32x64xf32>, vector<16x64xf32> -> vector<16x64xf32>
    %7 = arith.addf %3, %6 : vector<16x64xf32>
    %c0_6 = arith.constant 0 : index
    %c0_7 = arith.constant 0 : index
    %8 = vector.load %arg6[%c0_6, %c0_7] : memref<16x64xf32, #tpu.memory_space<vmem>>, vector<16x64xf32>
    tpu.vector_store %arg6[%c0_6, %c0_7], %7 {strides = array<i32>} : memref<16x64xf32, #tpu.memory_space<vmem>>, vector<16x64xf32>,
    %c0_i32_8 = arith.constant 0 : i32
    %9 = arith.cmpi eq, %arg2, %c0_i32_8 : i32
    %10 = arith.extui %9 : i1 to i32
    %c0_i32_9 = arith.constant 0 : i32
    %11 = arith.cmpi ne, %10, %c0_i32_9 : i32
    scf.if %11 {
      %c0_10 = arith.constant 0 : index
      %c0_11 = arith.constant 0 : index
      %12 = vector.load %arg6[%c0_10, %c0_11] : memref<16x64xf32, #tpu.memory_space<vmem>>, vector<16x64xf32>
      %c0_12 = arith.constant 0 : index
      %c0_13 = arith.constant 0 : index
      %13 = vector.load %arg5[%c0_12, %c0_13] : memref<1x64xf32, #tpu.memory_space<vmem>>, vector<1x64xf32>
      %14 = vector.broadcast %13 : vector<1x64xf32> to vector<16x64xf32>
      %15 = arith.addf %12, %14 : vector<16x64xf32>
      %c0_14 = arith.constant 0 : index
      %c0_15 = arith.constant 0 : index
      %16 = vector.load %arg6[%c0_14, %c0_15] : memref<16x64xf32, #tpu.memory_space<vmem>>, vector<16x64xf32>
      tpu.vector_store %arg6[%c0_14, %c0_15], %15 {strides = array<i32>} : memref<16x64xf32, #tpu.memory_space<vmem>>, vector<16x64xf32>,
    } else {
    }
    return
  }
  func.func @transform_0(%arg0: i32, %arg1: i32, %arg2: i32) -> (i32, i32) {
    %c0_i32 = arith.constant 0 : i32
    return %arg0, %arg2 : i32, i32
  }
  func.func @transform_1(%arg0: i32, %arg1: i32, %arg2: i32) -> (i32, i32) {
    %c0_i32 = arith.constant 0 : i32
    return %arg2, %arg1 : i32, i32
  }
  func.func @transform_2(%arg0: i32, %arg1: i32, %arg2: i32) -> (i32, i32) {
    %c0_i32 = arith.constant 0 : i32
    %c0_i32_0 = arith.constant 0 : i32
    return %c0_i32, %arg1 : i32, i32
  }
  func.func @transform_3(%arg0: i32, %arg1: i32, %arg2: i32) -> (i32, i32) {
    %c0_i32 = arith.constant 0 : i32
    return %arg0, %arg1 : i32, i32
  }
}

</mosaic_0001>

<llo_original>
// kernel: tpu_custom_call.1
$region0: #{tpu_custom_call.1}
  #allocation0 [shape = 'u32[]', space=smem, size = 0x4, offset = 0x4, fixed_abs, tag = 'smem constant byte address 0x4 - core index']
  #allocation1 [shape = 'u32[144,128]{1,0:T(1,128)}', space=vmem, size = 0x12000, scoped, tag = 'internal scratch']
  %s0 = inlined_call_operand.hbm [shape: f32[16,32], index: 0, kind: input, shape index: {}]
  %s1 = inlined_call_operand.hbm [shape: f32[32,64], index: 1, kind: input, shape index: {}]
  %s2 = inlined_call_operand.vmem [shape: f32[1,64], index: 2, kind: input, shape index: {}]
  %s3 = inlined_call_operand.hbm [shape: f32[16,64], index: 3, kind: output, shape index: {}]
  %s4 = sld [smem:[#allocation0]]
  $region38: #{tpu_custom_call.1} parent=0
    _
  %s6 = ssub.s32 1, %s4
  %s7 = scalar_select 0, %s6, %s4
  $region1: #{tpu_custom_call.1} parent=0
    #allocation2 [shape = 'u8[8192]{0}', space=vmem, size = 0x2000, scoped, tag = 'input window, operand 0, single buffered']
    #allocation3 [shape = 's32[1]{0}', space=sflag, size = 0x4, scoped, tag = 'scoped memory for tpu_custom_call.1']
    #allocation4 [shape = 's32[1]{0}', space=sflag, size = 0x4, scoped, tag = 'scoped memory for tpu_custom_call.1']
    #allocation5 [shape = 'u8[16384]{0}', space=vmem, size = 0x4000, scoped, tag = 'input window, operand 1, single buffered']
    #allocation6 [shape = 's32[1]{0}', space=sflag, size = 0x4, scoped, tag = 'scoped memory for tpu_custom_call.1']
    #allocation7 [shape = 'u8[8192]{0}', space=vmem, size = 0x2000, scoped, tag = 'output window, operand 0, single buffered']
    %8 = vsyncpa [#allocation3], 0
    %9 = vsyncpa [#allocation6], 0
    %10 = vsyncpa [#allocation4], 0
    // Predicated region
    $region2: #{tpu_custom_call.1} parent=1 // pred_check
      _
    $region3: #{tpu_custom_call.1} parent=1 // pred_check_branch
      %12 = sbr.rel (0) target = $region5
    $region4: #{tpu_custom_call.1} parent=1 // pred_region
      %s14 = ssub.s32 256, 256
      %15 = vsyncadd [#allocation3], %s14
      %s16 = sshll.u32 [#allocation2], 4
      %s17 = int_to_ptr.vmem [resolvable:$true] %s16
      %22 = dma.hbm_to_vmem [thread:$0]  %s0, 256, %s17, [#allocation3], 128, 128, 8
    $region5: #{tpu_custom_call.1} parent=1 // pred_fallthru
      _
    // Predicated region
    $region6: #{tpu_custom_call.1} parent=1 // pred_check
      _
    $region7: #{tpu_custom_call.1} parent=1 // pred_check_branch
      %24 = sbr.rel (0) target = $region9
    $region8: #{tpu_custom_call.1} parent=1 // pred_region
      %s26 = ssub.s32 512, 512
      %27 = vsyncadd [#allocation6], %s26
      %s28 = sshll.u32 [#allocation5], 4
      %s29 = int_to_ptr.vmem [resolvable:$true] %s28
      %34 = dma.hbm_to_vmem [thread:$0]  %s1, 512, %s29, [#allocation6], 128, 128, 8
    $region9: #{tpu_custom_call.1} parent=1 // pred_fallthru
      _
    // Predicated region
    $region10: #{tpu_custom_call.1} parent=1 // pred_check
      _
    $region11: #{tpu_custom_call.1} parent=1 // pred_check_branch
      %36 = sbr.rel (0) target = $region13
    $region12: #{tpu_custom_call.1} parent=1 // pred_region
      _
    $region13: #{tpu_custom_call.1} parent=1 // pred_fallthru
      _
    // Predicated region
    $region14: #{tpu_custom_call.1} parent=1 // pred_check
      _
    $region15: #{tpu_custom_call.1} parent=1 // pred_check_branch
      %38 = sbr.rel (0) target = $region17
    $region16: #{tpu_custom_call.1} parent=1 // pred_region
      %39 = dma.done [#allocation3], 256
    $region17: #{tpu_custom_call.1} parent=1 // pred_fallthru
      _
    // Predicated region
    $region18: #{tpu_custom_call.1} parent=1 // pred_check
      _
    $region19: #{tpu_custom_call.1} parent=1 // pred_check_branch
      %41 = sbr.rel (0) target = $region21
    $region20: #{tpu_custom_call.1} parent=1 // pred_region
      %42 = dma.done [#allocation6], 512
    $region21: #{tpu_custom_call.1} parent=1 // pred_fallthru
      _
    %p43 = scmp.eq.s32.totalorder 0, 0
    // Predicated region
    $region22: #{tpu_custom_call.1} parent=1 // pred_check
      %p44 = pneg %p43
    $region23: #{tpu_custom_call.1} parent=1 // pred_check_branch
      %46 = sbr.rel (%p44) target = $region25
    $region24: #{tpu_custom_call.1} parent=1 // pred_region
      %vm47 = vcmask 523264
      %48 = vst.msk [vmem:[#allocation7] sm:$0xff] %vm47, 0.0
      %49 = vst.msk [vmem:[#allocation7 + $0x8] sm:$0xff] %vm47, 0.0
    $region25: #{tpu_custom_call.1} parent=1 // pred_fallthru
      _
    %v50 = vld [vmem:[#allocation7] sm:$0xff]
    %v51 = vld [vmem:[#allocation7 + $0x8] sm:$0xff]
    %v52 = vld [vmem:[#allocation2] sm:$0xff]
    %v53 = vld [vmem:[#allocation2 + $0x8] sm:$0xff]
    %v54 = vld [vmem:[#allocation5] sm:$0xff]
    %v55 = vld [vmem:[#allocation5 + $0x8] sm:$0xff]
    %v56 = vld [vmem:[#allocation5 + $0x10] sm:$0xff]
    %v57 = vld [vmem:[#allocation5 + $0x18] sm:$0xff]
    %vm58 = vcmask 261120
    %v60 = vsel %vm58, %v52, 0
    %v63 = vsel %vm58, %v53, 0
    %65 = vmatprep.subr.mxu0 0.0
    %66 = vmatpush1.msra.mxu0 0.0
    %67 = vmatprep.subr.mxu0 0.0
    %68 = vmatpush1.msra.mxu0 0.0
    %69 = vmatprep.subr.mxu0 0.0
    %70 = vmatpush1.msra.mxu0 0.0
    %71 = vmatprep.subr.mxu0 0.0
    %72 = vmatpush1.msra.mxu0 0.0
    %73 = vmatprep.subr.mxu0 0.0
    %74 = vmatpush1.msra.mxu0 0.0
    %75 = vmatprep.subr.mxu0 0.0
    %76 = vmatpush1.msra.mxu0 0.0
    %77 = vmatprep.subr.mxu0 0.0
    %78 = vmatpush1.msra.mxu0 0.0
    %79 = vmatprep.subr.mxu0 0.0
    %80 = vmatpush1.msra.mxu0 0.0
    %81 = vmatprep.subr.mxu0 0.0
    %82 = vmatpush1.msra.mxu0 0.0
    %83 = vmatprep.subr.mxu0 0.0
    %84 = vmatpush1.msra.mxu0 0.0
    %85 = vmatprep.subr.mxu0 0.0
    %86 = vmatpush1.msra.mxu0 0.0
    %87 = vmatprep.subr.mxu0 0.0
    %88 = vmatpush1.msra.mxu0 0.0
    %89 = vmatprep.subr.mxu0 0.0
    %90 = vmatpush1.msra.mxu0 %v57
    %91 = vmatprep.subr.mxu0 0.0
    %92 = vmatpush1.msra.mxu0 %v56
    %93 = vmatprep.subr.mxu0 0.0
    %94 = vmatpush1.msra.mxu0 %v55
    %95 = vmatprep.subr.mxu0 0.0
    %96 = vmatpush1.msra.mxu0 %v54
    %97 = vmatprep.subr.mxu0 0.0
    %98 = vmatpush2.msra.mxu0 0.0
    %99 = vmatprep.subr.mxu0 0.0
    %100 = vmatpush2.msra.mxu0 0.0
    %101 = vmatprep.subr.mxu0 0.0
    %102 = vmatpush2.msra.mxu0 0.0
    %103 = vmatprep.subr.mxu0 0.0
    %104 = vmatpush2.msra.mxu0 0.0
    %105 = vmatprep.subr.mxu0 0.0
    %106 = vmatpush2.msra.mxu0 0.0
    %107 = vmatprep.subr.mxu0 0.0
    %108 = vmatpush2.msra.mxu0 0.0
    %109 = vmatprep.subr.mxu0 0.0
    %110 = vmatpush2.msra.mxu0 0.0
    %111 = vmatprep.subr.mxu0 0.0
    %112 = vmatpush2.msra.mxu0 0.0
    %113 = vmatprep.subr.mxu0 0.0
    %114 = vmatpush2.msra.mxu0 0.0
    %115 = vmatprep.subr.mxu0 0.0
    %116 = vmatpush2.msra.mxu0 0.0
    %117 = vmatprep.subr.mxu0 0.0
    %118 = vmatpush2.msra.mxu0 0.0
    %119 = vmatprep.subr.mxu0 0.0
    %120 = vmatpush2.msra.mxu0 0.0
    %121 = vmatprep.subr.mxu0 0.0
    %122 = vmatpush2.msra.mxu0 0.0
    %123 = vmatprep.subr.mxu0 0.0
    %124 = vmatpush2.msra.mxu0 0.0
    %125 = vmatprep.subr.mxu0 0.0
    %126 = vmatpush2.msra.mxu0 0.0
    %127 = vmatprep.subr.mxu0 0.0
    %128 = vmatpush2.msra.mxu0 0.0
    %129 = vmatprep.mubr.f32.mxu0 0.0
    %130 = vmatmul.mubr.f32.gmra.mxu0 %v60
    %v131 = vpop.f32.mrf.mxu0
    %v132 = vadd.f32 0.0, %v131
    %v133 = vpop.f32.mrf.mxu0
    %134 = vmatprep.mubr.f32.mxu0 0.0
    %135 = vmatmul.mubr.f32.gmra.mxu0 %v63
    %v136 = vpop.f32.mrf.mxu0
    %v137 = vadd.f32 0.0, %v136
    %v138 = vpop.f32.mrf.mxu0
    %139 = vdwg.mxu0
    %v140 = vadd.f32 %v50, %v132
    %v141 = vadd.f32 %v51, %v137
    %vm142 = vcmask 523264
    %143 = vst.msk [vmem:[#allocation7] sm:$0xff] %vm142, %v140
    %144 = vst.msk [vmem:[#allocation7 + $0x8] sm:$0xff] %vm142, %v141
    // Predicated region
    $region26: #{tpu_custom_call.1} parent=1 // pred_check
      %p145 = pneg %p43
    $region27: #{tpu_custom_call.1} parent=1 // pred_check_branch
      %147 = sbr.rel (%p145) target = $region29
    $region28: #{tpu_custom_call.1} parent=1 // pred_region
      %v148 = vld [vmem:[#allocation7] sm:$0xff]
      %v149 = vld [vmem:[#allocation7 + $0x8] sm:$0xff]
      %v150 = vld [vmem:[%s2] sm:$0x1]
      %v152 = vlaneseq
      %v153 = vshrl.u32 %v152, 7
      %v154 = vsub.s32 0, %v153
      %v155 = vrot.slane %v150, %v154
      %v157 = vadd.f32 %v148, %v155
      %v158 = vadd.f32 %v149, %v155
      %159 = vst.msk [vmem:[#allocation7] sm:$0xff] %vm142, %v157
      %160 = vst.msk [vmem:[#allocation7 + $0x8] sm:$0xff] %vm142, %v158
    $region29: #{tpu_custom_call.1} parent=1 // pred_fallthru
      _
    // Predicated region
    $region30: #{tpu_custom_call.1} parent=1 // pred_check
      _
    $region31: #{tpu_custom_call.1} parent=1 // pred_check_branch
      %162 = sbr.rel (0) target = $region33
    $region32: #{tpu_custom_call.1} parent=1 // pred_region
      %s164 = ssub.s32 256, 256
      %165 = vsyncadd [#allocation4], %s164
      %s166 = sshll.u32 [#allocation7], 4
      %s167 = int_to_ptr.vmem [resolvable:$true] %s166
      %172 = dma.vmem_to_hbm [thread:$0]  %s167, 256, %s3, [#allocation4], 128, 128, 8
    $region33: #{tpu_custom_call.1} parent=1 // pred_fallthru
      _
    // Predicated region
    $region34: #{tpu_custom_call.1} parent=1 // pred_check
      _
    $region35: #{tpu_custom_call.1} parent=1 // pred_check_branch
      %174 = sbr.rel (0) target = $region37
    $region36: #{tpu_custom_call.1} parent=1 // pred_region
      %175 = dma.done [#allocation4], 256
    $region37: #{tpu_custom_call.1} parent=1 // pred_fallthru
      _
    %176 = vsyncpa [#allocation3], 1
    %177 = vsyncpa [#allocation6], 1
    %178 = vsyncpa [#allocation4], 1

</llo_original>
